<compile_context>
chip_gen: v7x
topology: tpu7x:2x2x1
jax: 0.10.0
libtpu: 0.0.40
codegen_flags: <defaults>
</compile_context>

<pallas_src>
import functools
import math
import random

import jax
import jax.numpy as jnp
from jax.experimental import pallas as pl
from jax.experimental.pallas import tpu as pltpu

LANE = 128        # lane width: last dims padded to a multiple of this
SUBLANE = 8       # sublane width: batch tiles aligned to this
MAX_MID = 3       # static max of random.randint(0, 3) in the PyTorch forward


def _round_up(x, m):
    return (x + m - 1) // m * m


def _pad2d(a, rows, cols):
    return jnp.pad(a, ((0, rows - a.shape[0]), (0, cols - a.shape[1])))


def dynamic_net_kernel(n_mid_ref,                      # scalar prefetch (SMEM)
                       x_ref, w_in_ref, b_in_ref,      # inputs (VMEM; bf16 ops, f32 biases)
                       w_mid_ref, b_mid_ref,
                       w_out_ref, b_out_ref,
                       y_ref,                          # output (VMEM, f32)
                       h_ref,                          # scratch (VMEM, bf16)
                       *, max_mid):
    n_mid = n_mid_ref[0]

    # h_relu = clamp(input_linear(x), min=0)   -- bf16 operands, f32 accumulation.
    # Bias add + ReLU in f32, then one cast to bf16 at the scratch store.
    h = jnp.dot(x_ref[...], w_in_ref[...], preferred_element_type=jnp.float32)
    h_ref[...] = jnp.maximum(h + b_in_ref[...], 0.0).astype(h_ref.dtype)

    # Hoist loop-invariant operand loads and the bias broadcast out of the unroll
    # (JAX does not CSE broadcast_in_dim; the static unroll would re-emit them).
    w_mid = w_mid_ref[...]
    b_mid = jnp.broadcast_to(b_mid_ref[...], (h_ref.shape[0], h_ref.shape[1]))

    # Up to max_mid middle layers, gated at runtime by the SMEM scalar n_mid
    # (per-call dynamic depth, matching the PyTorch random.randint(0, 3) loop).
    for i in range(max_mid):
        @pl.when(i < n_mid)
        def _():
            hm = jnp.dot(h_ref[...], w_mid, preferred_element_type=jnp.float32)
            h_ref[...] = jnp.maximum(hm + b_mid, 0.0).astype(h_ref.dtype)

    # y_pred = output_linear(h_relu)
    y = jnp.dot(h_ref[...], w_out_ref[...], preferred_element_type=jnp.float32)
    y_ref[...] = (y + b_out_ref[...]).astype(y_ref.dtype)


def dynamic_net_forward(x, params, n_mid, *, max_mid=MAX_MID):
    """x: [B, D_in] float32.  params: f32 weights stored pre-transposed [in, out],
    biases [1, out].  n_mid: runtime scalar (0..max_mid) = number of middle layers."""
    B, d_in = x.shape
    h_dim = params["w_in"].shape[1]
    d_out = params["w_out"].shape[1]

    # Lane-dense padded dims and sublane-aligned batch tiling.
    d_in_p = _round_up(d_in, LANE)
    h_p = _round_up(h_dim, LANE)
    d_out_p = _round_up(d_out, LANE)
    tile_b = min(512, _round_up(B, SUBLANE))
    b_p = _round_up(B, tile_b)
    grid_b = b_p // tile_b

    # Zero-padded, bf16 operands (padding contributes exact zeros to the f32 acc).
    x_p = _pad2d(x, b_p, d_in_p).astype(jnp.bfloat16)
    w_in = _pad2d(params["w_in"], d_in_p, h_p).astype(jnp.bfloat16)
    w_mid = _pad2d(params["w_mid"], h_p, h_p).astype(jnp.bfloat16)
    w_out = _pad2d(params["w_out"], h_p, d_out_p).astype(jnp.bfloat16)
    b_in = _pad2d(params["b_in"], 1, h_p).astype(jnp.float32)
    b_mid = _pad2d(params["b_mid"], 1, h_p).astype(jnp.float32)
    b_out = _pad2d(params["b_out"], 1, d_out_p).astype(jnp.float32)

    n_mid_arr = jnp.asarray(n_mid, jnp.int32).reshape((1,))

    flops = 2 * b_p * (d_in_p * h_p + max_mid * h_p * h_p + h_p * d_out_p)
    bytes_accessed = (x_p.size * 2 + w_in.size * 2 + w_mid.size * 2 + w_out.size * 2
                      + (b_in.size + b_mid.size + b_out.size) * 4
                      + b_p * d_out_p * 4)

    kernel = functools.partial(dynamic_net_kernel, max_mid=max_mid)

    y_pad = pl.pallas_call(
        kernel,
        out_shape=jax.ShapeDtypeStruct((b_p, d_out_p), jnp.float32),
        grid_spec=pltpu.PrefetchScalarGridSpec(
            num_scalar_prefetch=1,
            grid=(grid_b,),
            in_specs=[
                # x: tiled along the batch grid axis
                pl.BlockSpec((tile_b, d_in_p), lambda b, n: (b, 0)),
                # weights / biases: constant index_map -> stay VMEM-resident
                pl.BlockSpec((d_in_p, h_p), lambda b, n: (0, 0)),
                pl.BlockSpec((1, h_p), lambda b, n: (0, 0)),
                pl.BlockSpec((h_p, h_p), lambda b, n: (0, 0)),
                pl.BlockSpec((1, h_p), lambda b, n: (0, 0)),
                pl.BlockSpec((h_p, d_out_p), lambda b, n: (0, 0)),
                pl.BlockSpec((1, d_out_p), lambda b, n: (0, 0)),
            ],
            out_specs=pl.BlockSpec((tile_b, d_out_p), lambda b, n: (b, 0)),
            scratch_shapes=[pltpu.VMEM((tile_b, h_p), jnp.bfloat16)],
        ),
        compiler_params=pltpu.CompilerParams(
            dimension_semantics=("parallel",)),
        cost_estimate=pl.CostEstimate(flops=flops, transcendentals=0,
                                      bytes_accessed=bytes_accessed),
    )(n_mid_arr, x_p, w_in, b_in, w_mid, b_mid, w_out, b_out)

    return y_pad[:B, :d_out]


def init_params(key, d_in, h, d_out):
    """Mimic torch.nn.Linear default init: U(-1/sqrt(fan_in), 1/sqrt(fan_in)).
    Weights stored transposed ([in, out]) for the kernel; biases as [1, out]."""
    ks = jax.random.split(key, 6)

    def lin(kw, kb, fan_in, fan_out):
        bound = 1.0 / math.sqrt(fan_in)
        w = jax.random.uniform(kw, (fan_in, fan_out), jnp.float32, -bound, bound)
        b = jax.random.uniform(kb, (1, fan_out), jnp.float32, -bound, bound)
        return w, b

    w_in, b_in = lin(ks[0], ks[1], d_in, h)
    w_mid, b_mid = lin(ks[2], ks[3], h, h)
    w_out, b_out = lin(ks[4], ks[5], h, d_out)
    return dict(w_in=w_in, b_in=b_in, w_mid=w_mid, b_mid=b_mid,
                w_out=w_out, b_out=b_out)


def reference_forward_bf16(x, params, n_mid):
    """Pure-JAX reference with the same bf16-operand / f32-accumulation pattern."""
    bf = jnp.bfloat16
    h = jnp.maximum(
        jnp.dot(x.astype(bf), params["w_in"].astype(bf),
                preferred_element_type=jnp.float32) + params["b_in"], 0.0)
    for _ in range(n_mid):
        h = jnp.maximum(
            jnp.dot(h.astype(bf), params["w_mid"].astype(bf),
                    preferred_element_type=jnp.float32) + params["b_mid"], 0.0)
    return jnp.dot(h.astype(bf), params["w_out"].astype(bf),
                   preferred_element_type=jnp.float32) + params["b_out"]


if __name__ == "__main__":
    # Small shapes consistent with the module: batch=8, D_in=16, H=32, D_out=8
    B, D_IN, H, D_OUT = 8, 16, 32, 8

    key = jax.random.PRNGKey(0)
    k_x, k_p = jax.random.split(key)
    x = jax.random.normal(k_x, (B, D_IN), jnp.float32)
    params = init_params(k_p, D_IN, H, D_OUT)

    # Per-call dynamic depth like the PyTorch forward's random.randint(0, 3);
    # the kernel takes it as a runtime scalar, so no recompile when it changes.
    random.seed(0)
    n_mid = random.randint(0, MAX_MID)

    y = dynamic_net_forward(x, params, n_mid)
    jax.block_until_ready(y)
    assert y.shape == (B, D_OUT)

    # Check against a pure-JAX reference with the same precision pattern.
    y_ref = reference_forward_bf16(x, params, n_mid)
    assert jnp.allclose(y, y_ref, atol=2e-3, rtol=2e-3), \
        f"max abs diff {jnp.max(jnp.abs(y - y_ref))}"

    # Exercise all dynamic depths (0..3) without recompiling; check each.
    for d in range(MAX_MID + 1):
        yd = dynamic_net_forward(x, params, d)
        yd_ref = reference_forward_bf16(x, params, d)
        assert jnp.allclose(yd, yd_ref, atol=2e-3, rtol=2e-3), \
            f"depth {d}: max abs diff {jnp.max(jnp.abs(yd - yd_ref))}"

    # Coarse sanity check against the full-f32 reference (bf16 operand rounding only).
    h32 = jnp.maximum(x @ params["w_in"] + params["b_in"], 0.0)
    for _ in range(n_mid):
        h32 = jnp.maximum(h32 @ params["w_mid"] + params["b_mid"], 0.0)
    y32 = h32 @ params["w_out"] + params["b_out"]
    assert jnp.allclose(y, y32, atol=5e-2, rtol=5e-2)

    print("KERNEL_OK")
</pallas_src>

<mosaic_0001>
module attributes {stable_mosaic.version = 11 : i64} {
  func.func @dynamic_net_kernel(%arg0: i32, %arg1: memref<1xi32, #tpu.memory_space<smem>>, %arg2: memref<8x128xbf16, #tpu.memory_space<vmem>>, %arg3: memref<128x128xbf16, #tpu.memory_space<vmem>>, %arg4: memref<1x128xf32, #tpu.memory_space<vmem>>, %arg5: memref<128x128xbf16, #tpu.memory_space<vmem>>, %arg6: memref<1x128xf32, #tpu.memory_space<vmem>>, %arg7: memref<128x128xbf16, #tpu.memory_space<vmem>>, %arg8: memref<1x128xf32, #tpu.memory_space<vmem>>, %arg9: memref<8x128xf32, #tpu.memory_space<vmem>>, %arg10: memref<8x128xbf16, #tpu.memory_space<vmem>>) attributes {dimension_semantics = [#tpu.dimension_semantics<parallel>], iteration_bounds = array<i64: 1>, scalar_prefetch = 1 : i64, scratch_operands = 1 : i64, tpu.core_type = #tpu.core_type<tc>, window_params = [{transform_indices = @transform_0, window_bounds = array<i64: 8, 128>}, {pipeline_mode = #tpu.pipeline_mode<synchronous>, transform_indices = @transform_1, window_bounds = array<i64: 128, 128>}, {pipeline_mode = #tpu.pipeline_mode<synchronous>, transform_indices = @transform_2, window_bounds = array<i64: 1, 128>}, {pipeline_mode = #tpu.pipeline_mode<synchronous>, transform_indices = @transform_3, window_bounds = array<i64: 128, 128>}, {pipeline_mode = #tpu.pipeline_mode<synchronous>, transform_indices = @transform_4, window_bounds = array<i64: 1, 128>}, {pipeline_mode = #tpu.pipeline_mode<synchronous>, transform_indices = @transform_5, window_bounds = array<i64: 128, 128>}, {pipeline_mode = #tpu.pipeline_mode<synchronous>, transform_indices = @transform_6, window_bounds = array<i64: 1, 128>}, {transform_indices = @transform_7, window_bounds = array<i64: 8, 128>}]} {
    %c0 = arith.constant 0 : index
    %0 = memref.load %arg1[%c0] : memref<1xi32, #tpu.memory_space<smem>>
    %c0_0 = arith.constant 0 : index
    %c0_1 = arith.constant 0 : index
    %1 = vector.load %arg2[%c0_0, %c0_1] : memref<8x128xbf16, #tpu.memory_space<vmem>>, vector<8x128xbf16>
    %c0_2 = arith.constant 0 : index
    %c0_3 = arith.constant 0 : index
    %2 = vector.load %arg3[%c0_2, %c0_3] : memref<128x128xbf16, #tpu.memory_space<vmem>>, vector<128x128xbf16>
    %cst = arith.constant dense<0.000000e+00> : vector<8x128xf32>
    %3 = tpu.matmul %1, %2, %cst {dimension_numbers = #tpu.dot_dimension_numbers<[1], [0], [0], [1], [0, 0, 1, 1], [], []>} : vector<8x128xbf16>, vector<128x128xbf16>, vector<8x128xf32> -> vector<8x128xf32>
    %c0_4 = arith.constant 0 : index
    %c0_5 = arith.constant 0 : index
    %4 = vector.load %arg4[%c0_4, %c0_5] : memref<1x128xf32, #tpu.memory_space<vmem>>, vector<1x128xf32>
    %5 = vector.broadcast %4 : vector<1x128xf32> to vector<8x128xf32>
    %6 = arith.addf %3, %5 : vector<8x128xf32>
    %cst_6 = arith.constant 0.000000e+00 : f32
    %7 = vector.broadcast %cst_6 : f32 to vector<8x128xf32>
    %8 = arith.maximumf %6, %7 : vector<8x128xf32>
    %9 = arith.truncf %8 : vector<8x128xf32> to vector<8x128xbf16>
    %c0_7 = arith.constant 0 : index
    %c0_8 = arith.constant 0 : index
    %10 = vector.load %arg10[%c0_7, %c0_8] : memref<8x128xbf16, #tpu.memory_space<vmem>>, vector<8x128xbf16>
    tpu.vector_store %arg10[%c0_7, %c0_8], %9 {strides = array<i32>} : memref<8x128xbf16, #tpu.memory_space<vmem>>, vector<8x128xbf16>,
    %c0_9 = arith.constant 0 : index
    %c0_10 = arith.constant 0 : index
    %11 = vector.load %arg5[%c0_9, %c0_10] : memref<128x128xbf16, #tpu.memory_space<vmem>>, vector<128x128xbf16>
    %c0_11 = arith.constant 0 : index
    %c0_12 = arith.constant 0 : index
    %12 = vector.load %arg6[%c0_11, %c0_12] : memref<1x128xf32, #tpu.memory_space<vmem>>, vector<1x128xf32>
    %13 = vector.shape_cast %12 : vector<1x128xf32> to vector<1x128xf32>
    %14 = vector.broadcast %13 : vector<1x128xf32> to vector<8x128xf32>
    %c0_i32 = arith.constant 0 : i32
    %15 = arith.cmpi sgt, %0, %c0_i32 : i32
    %16 = arith.extui %15 : i1 to i32
    %c0_i32_13 = arith.constant 0 : i32
    %17 = arith.cmpi ne, %16, %c0_i32_13 : i32
    scf.if %17 {
      %c0_25 = arith.constant 0 : index
      %c0_26 = arith.constant 0 : index
      %31 = vector.load %arg10[%c0_25, %c0_26] : memref<8x128xbf16, #tpu.memory_space<vmem>>, vector<8x128xbf16>
      %cst_27 = arith.constant dense<0.000000e+00> : vector<8x128xf32>
      %32 = tpu.matmul %31, %11, %cst_27 {dimension_numbers = #tpu.dot_dimension_numbers<[1], [0], [0], [1], [0, 0, 1, 1], [], []>} : vector<8x128xbf16>, vector<128x128xbf16>, vector<8x128xf32> -> vector<8x128xf32>
      %33 = arith.addf %32, %14 : vector<8x128xf32>
      %cst_28 = arith.constant 0.000000e+00 : f32
      %34 = vector.broadcast %cst_28 : f32 to vector<8x128xf32>
      %35 = arith.maximumf %33, %34 : vector<8x128xf32>
      %36 = arith.truncf %35 : vector<8x128xf32> to vector<8x128xbf16>
      %c0_29 = arith.constant 0 : index
      %c0_30 = arith.constant 0 : index
      %37 = vector.load %arg10[%c0_29, %c0_30] : memref<8x128xbf16, #tpu.memory_space<vmem>>, vector<8x128xbf16>
      tpu.vector_store %arg10[%c0_29, %c0_30], %36 {strides = array<i32>} : memref<8x128xbf16, #tpu.memory_space<vmem>>, vector<8x128xbf16>,
    } else {
    }
    %c1_i32 = arith.constant 1 : i32
    %18 = arith.cmpi sgt, %0, %c1_i32 : i32
    %19 = arith.extui %18 : i1 to i32
    %c0_i32_14 = arith.constant 0 : i32
    %20 = arith.cmpi ne, %19, %c0_i32_14 : i32
    scf.if %20 {
      %c0_25 = arith.constant 0 : index
      %c0_26 = arith.constant 0 : index
      %31 = vector.load %arg10[%c0_25, %c0_26] : memref<8x128xbf16, #tpu.memory_space<vmem>>, vector<8x128xbf16>
      %cst_27 = arith.constant dense<0.000000e+00> : vector<8x128xf32>
      %32 = tpu.matmul %31, %11, %cst_27 {dimension_numbers = #tpu.dot_dimension_numbers<[1], [0], [0], [1], [0, 0, 1, 1], [], []>} : vector<8x128xbf16>, vector<128x128xbf16>, vector<8x128xf32> -> vector<8x128xf32>
      %33 = arith.addf %32, %14 : vector<8x128xf32>
      %cst_28 = arith.constant 0.000000e+00 : f32
      %34 = vector.broadcast %cst_28 : f32 to vector<8x128xf32>
      %35 = arith.maximumf %33, %34 : vector<8x128xf32>
      %36 = arith.truncf %35 : vector<8x128xf32> to vector<8x128xbf16>
      %c0_29 = arith.constant 0 : index
      %c0_30 = arith.constant 0 : index
      %37 = vector.load %arg10[%c0_29, %c0_30] : memref<8x128xbf16, #tpu.memory_space<vmem>>, vector<8x128xbf16>
      tpu.vector_store %arg10[%c0_29, %c0_30], %36 {strides = array<i32>} : memref<8x128xbf16, #tpu.memory_space<vmem>>, vector<8x128xbf16>,
    } else {
    }
    %c2_i32 = arith.constant 2 : i32
    %21 = arith.cmpi sgt, %0, %c2_i32 : i32
    %22 = arith.extui %21 : i1 to i32
    %c0_i32_15 = arith.constant 0 : i32
    %23 = arith.cmpi ne, %22, %c0_i32_15 : i32
    scf.if %23 {
      %c0_25 = arith.constant 0 : index
      %c0_26 = arith.constant 0 : index
      %31 = vector.load %arg10[%c0_25, %c0_26] : memref<8x128xbf16, #tpu.memory_space<vmem>>, vector<8x128xbf16>
      %cst_27 = arith.constant dense<0.000000e+00> : vector<8x128xf32>
      %32 = tpu.matmul %31, %11, %cst_27 {dimension_numbers = #tpu.dot_dimension_numbers<[1], [0], [0], [1], [0, 0, 1, 1], [], []>} : vector<8x128xbf16>, vector<128x128xbf16>, vector<8x128xf32> -> vector<8x128xf32>
      %33 = arith.addf %32, %14 : vector<8x128xf32>
      %cst_28 = arith.constant 0.000000e+00 : f32
      %34 = vector.broadcast %cst_28 : f32 to vector<8x128xf32>
      %35 = arith.maximumf %33, %34 : vector<8x128xf32>
      %36 = arith.truncf %35 : vector<8x128xf32> to vector<8x128xbf16>
      %c0_29 = arith.constant 0 : index
      %c0_30 = arith.constant 0 : index
      %37 = vector.load %arg10[%c0_29, %c0_30] : memref<8x128xbf16, #tpu.memory_space<vmem>>, vector<8x128xbf16>
      tpu.vector_store %arg10[%c0_29, %c0_30], %36 {strides = array<i32>} : memref<8x128xbf16, #tpu.memory_space<vmem>>, vector<8x128xbf16>,
    } else {
    }
    %c0_16 = arith.constant 0 : index
    %c0_17 = arith.constant 0 : index
    %24 = vector.load %arg10[%c0_16, %c0_17] : memref<8x128xbf16, #tpu.memory_space<vmem>>, vector<8x128xbf16>
    %c0_18 = arith.constant 0 : index
    %c0_19 = arith.constant 0 : index
    %25 = vector.load %arg7[%c0_18, %c0_19] : memref<128x128xbf16, #tpu.memory_space<vmem>>, vector<128x128xbf16>
    %cst_20 = arith.constant dense<0.000000e+00> : vector<8x128xf32>
    %26 = tpu.matmul %24, %25, %cst_20 {dimension_numbers = #tpu.dot_dimension_numbers<[1], [0], [0], [1], [0, 0, 1, 1], [], []>} : vector<8x128xbf16>, vector<128x128xbf16>, vector<8x128xf32> -> vector<8x128xf32>
    %c0_21 = arith.constant 0 : index
    %c0_22 = arith.constant 0 : index
    %27 = vector.load %arg8[%c0_21, %c0_22] : memref<1x128xf32, #tpu.memory_space<vmem>>, vector<1x128xf32>
    %28 = vector.broadcast %27 : vector<1x128xf32> to vector<8x128xf32>
    %29 = arith.addf %26, %28 : vector<8x128xf32>
    %c0_23 = arith.constant 0 : index
    %c0_24 = arith.constant 0 : index
    %30 = vector.load %arg9[%c0_23, %c0_24] : memref<8x128xf32, #tpu.memory_space<vmem>>, vector<8x128xf32>
    tpu.vector_store %arg9[%c0_23, %c0_24], %29 {strides = array<i32>} : memref<8x128xf32, #tpu.memory_space<vmem>>, vector<8x128xf32>,
    return
  }
  func.func @transform_0(%arg0: i32, %arg1: memref<1xi32, #tpu.memory_space<smem>>) -> (i32, i32) {
    %c0_i32 = arith.constant 0 : i32
    %c0_i32_0 = arith.constant 0 : i32
    return %arg0, %c0_i32 : i32, i32
  }
  func.func @transform_1(%arg0: i32, %arg1: memref<1xi32, #tpu.memory_space<smem>>) -> (i32, i32) {
    %c0_i32 = arith.constant 0 : i32
    %c0_i32_0 = arith.constant 0 : i32
    %c0_i32_1 = arith.constant 0 : i32
    return %c0_i32, %c0_i32_0 : i32, i32
  }
  func.func @transform_2(%arg0: i32, %arg1: memref<1xi32, #tpu.memory_space<smem>>) -> (i32, i32) {
    %c0_i32 = arith.constant 0 : i32
    %c0_i32_0 = arith.constant 0 : i32
    %c0_i32_1 = arith.constant 0 : i32
    return %c0_i32, %c0_i32_0 : i32, i32
  }
  func.func @transform_3(%arg0: i32, %arg1: memref<1xi32, #tpu.memory_space<smem>>) -> (i32, i32) {
    %c0_i32 = arith.constant 0 : i32
    %c0_i32_0 = arith.constant 0 : i32
    %c0_i32_1 = arith.constant 0 : i32
    return %c0_i32, %c0_i32_0 : i32, i32
  }
  func.func @transform_4(%arg0: i32, %arg1: memref<1xi32, #tpu.memory_space<smem>>) -> (i32, i32) {
    %c0_i32 = arith.constant 0 : i32
    %c0_i32_0 = arith.constant 0 : i32
    %c0_i32_1 = arith.constant 0 : i32
    return %c0_i32, %c0_i32_0 : i32, i32
  }
  func.func @transform_5(%arg0: i32, %arg1: memref<1xi32, #tpu.memory_space<smem>>) -> (i32, i32) {
    %c0_i32 = arith.constant 0 : i32
    %c0_i32_0 = arith.constant 0 : i32
    %c0_i32_1 = arith.constant 0 : i32
    return %c0_i32, %c0_i32_0 : i32, i32
  }
  func.func @transform_6(%arg0: i32, %arg1: memref<1xi32, #tpu.memory_space<smem>>) -> (i32, i32) {
    %c0_i32 = arith.constant 0 : i32
    %c0_i32_0 = arith.constant 0 : i32
    %c0_i32_1 = arith.constant 0 : i32
    return %c0_i32, %c0_i32_0 : i32, i32
  }
  func.func @transform_7(%arg0: i32, %arg1: memref<1xi32, #tpu.memory_space<smem>>) -> (i32, i32) {
    %c0_i32 = arith.constant 0 : i32
    %c0_i32_0 = arith.constant 0 : i32
    return %arg0, %c0_i32 : i32, i32
  }
}

</mosaic_0001>

<llo_original>
// kernel: tpu_custom_call.1
$region0: #{tpu_custom_call.1}
  #allocation0 [shape = 'u32[]', space=smem, size = 0x4, offset = 0x4, fixed_abs, tag = 'smem constant byte address 0x4 - core index']
  #allocation1 [shape = 'u32[144,128]{1,0:T(1,128)}', space=vmem, size = 0x12000, scoped, tag = 'internal scratch']
  #allocation2 [shape = 'bf16[8,128]{1,0:T(8,128)(2,1)}', space=vmem, size = 0x800, scoped, tag = 'scratch operand']
  #allocation3 [shape = 's32[1]{0}', space=sflag, size = 0x4, scoped, tag = 'scoped memory for tpu_custom_call.1']
  #allocation4 [shape = 's32[1]{0:T(128)S(6)}', space=smem, size = 0x200, scoped, tag = 'prefetched SMEM operand 0']
  %s0 = inlined_call_operand.<no memory space> [shape: s32[1], index: 0, kind: input, shape index: {}]
  %s1 = inlined_call_operand.hbm [shape: bf16[8,128], index: 1, kind: input, shape index: {}]
  %s2 = inlined_call_operand.hbm [shape: bf16[128,128], index: 2, kind: input, shape index: {}]
  %s3 = inlined_call_operand.vmem [shape: f32[1,128], index: 3, kind: input, shape index: {}]
  %s4 = inlined_call_operand.hbm [shape: bf16[128,128], index: 4, kind: input, shape index: {}]
  %s5 = inlined_call_operand.vmem [shape: f32[1,128], index: 5, kind: input, shape index: {}]
  %s6 = inlined_call_operand.hbm [shape: bf16[128,128], index: 6, kind: input, shape index: {}]
  %s7 = inlined_call_operand.vmem [shape: f32[1,128], index: 7, kind: input, shape index: {}]
  %s8 = inlined_call_operand.hbm [shape: f32[8,128], index: 8, kind: output, shape index: {}]
  %s9 = sld [smem:[#allocation0]]
  $region66: #{tpu_custom_call.1} parent=0
    _
  %s11 = ssub.s32 1, %s9
  %s12 = scalar_select 0, %s11, %s9
  %13 = sst [smem:[#allocation4]] %s0
  $region1: #{tpu_custom_call.1} parent=0
    #allocation5 [shape = 'u8[2048]{0}', space=vmem, size = 0x800, scoped, tag = 'input window, operand 1, single buffered']
    #allocation6 [shape = 's32[1]{0}', space=sflag, size = 0x4, scoped, tag = 'scoped memory for tpu_custom_call.1']
    #allocation7 [shape = 's32[1]{0}', space=sflag, size = 0x4, scoped, tag = 'scoped memory for tpu_custom_call.1']
    #allocation8 [shape = 'u8[32768]{0}', space=vmem, size = 0x8000, scoped, tag = 'input window, operand 2, single buffered']
    #allocation9 [shape = 's32[1]{0}', space=sflag, size = 0x4, scoped, tag = 'scoped memory for tpu_custom_call.1']
    #allocation10 [shape = 'u8[32768]{0}', space=vmem, size = 0x8000, scoped, tag = 'input window, operand 4, single buffered']
    #allocation11 [shape = 'u8[32768]{0}', space=vmem, size = 0x8000, scoped, tag = 'input window, operand 6, single buffered']
    #allocation12 [shape = 's32[1]{0}', space=sflag, size = 0x4, scoped, tag = 'scoped memory for tpu_custom_call.1']
    #allocation13 [shape = 'u8[4096]{0}', space=vmem, size = 0x1000, scoped, tag = 'output window, operand 0, single buffered']
    %14 = vsyncpa [#allocation6], 0
    %15 = vsyncpa [#allocation9], 0
    %16 = vsyncpa [#allocation12], 0
    %17 = vsyncpa [#allocation7], 0
    // Predicated region
    $region2: #{tpu_custom_call.1} parent=1 // pred_check
      _
    $region3: #{tpu_custom_call.1} parent=1 // pred_check_branch
      %19 = sbr.rel (0) target = $region5
    $region4: #{tpu_custom_call.1} parent=1 // pred_region
      %s21 = ssub.s32 64, 64
      %22 = vsyncadd [#allocation6], %s21
      %s24 = sshll.u32 [#allocation5], 4
      %s25 = int_to_ptr.vmem [resolvable:$true] %s24
      %27 = dma.hbm_to_vmem [thread:$0]  %s1, 64, %s25, [#allocation6]
    $region5: #{tpu_custom_call.1} parent=1 // pred_fallthru
      _
    // Predicated region
    $region6: #{tpu_custom_call.1} parent=1 // pred_check
      _
    $region7: #{tpu_custom_call.1} parent=1 // pred_check_branch
      %29 = sbr.rel (0) target = $region9
    $region8: #{tpu_custom_call.1} parent=1 // pred_region
      %s31 = ssub.s32 1024, 1024
      %32 = vsyncadd [#allocation9], %s31
      %s33 = sshll.u32 [#allocation8], 4
      %s34 = int_to_ptr.vmem [resolvable:$true] %s33
      %39 = dma.hbm_to_vmem [thread:$0]  %s2, 1024, %s34, [#allocation9], 64, 64, 4
    $region9: #{tpu_custom_call.1} parent=1 // pred_fallthru
      _
    // Predicated region
    $region10: #{tpu_custom_call.1} parent=1 // pred_check
      _
    $region11: #{tpu_custom_call.1} parent=1 // pred_check_branch
      %41 = sbr.rel (0) target = $region13
    $region12: #{tpu_custom_call.1} parent=1 // pred_region
      _
    $region13: #{tpu_custom_call.1} parent=1 // pred_fallthru
      _
    // Predicated region
    $region14: #{tpu_custom_call.1} parent=1 // pred_check
      _
    $region15: #{tpu_custom_call.1} parent=1 // pred_check_branch
      %43 = sbr.rel (0) target = $region17
    $region16: #{tpu_custom_call.1} parent=1 // pred_region
      %s45 = ssub.s32 1024, 1024
      %46 = vsyncadd [#allocation9], %s45
      %s47 = sshll.u32 [#allocation10], 4
      %s48 = int_to_ptr.vmem [resolvable:$true] %s47
      %53 = dma.hbm_to_vmem [thread:$0]  %s4, 1024, %s48, [#allocation9], 64, 64, 4
    $region17: #{tpu_custom_call.1} parent=1 // pred_fallthru
      _
    // Predicated region
    $region18: #{tpu_custom_call.1} parent=1 // pred_check
      _
    $region19: #{tpu_custom_call.1} parent=1 // pred_check_branch
      %55 = sbr.rel (0) target = $region21
    $region20: #{tpu_custom_call.1} parent=1 // pred_region
      _
    $region21: #{tpu_custom_call.1} parent=1 // pred_fallthru
      _
    // Predicated region
    $region22: #{tpu_custom_call.1} parent=1 // pred_check
      _
    $region23: #{tpu_custom_call.1} parent=1 // pred_check_branch
      %57 = sbr.rel (0) target = $region25
    $region24: #{tpu_custom_call.1} parent=1 // pred_region
      %s59 = ssub.s32 1024, 1024
      %60 = vsyncadd [#allocation12], %s59
      %s61 = sshll.u32 [#allocation11], 4
      %s62 = int_to_ptr.vmem [resolvable:$true] %s61
      %67 = dma.hbm_to_vmem [thread:$0]  %s6, 1024, %s62, [#allocation12], 64, 64, 4
    $region25: #{tpu_custom_call.1} parent=1 // pred_fallthru
      _
    // Predicated region
    $region26: #{tpu_custom_call.1} parent=1 // pred_check
      _
    $region27: #{tpu_custom_call.1} parent=1 // pred_check_branch
      %69 = sbr.rel (0) target = $region29
    $region28: #{tpu_custom_call.1} parent=1 // pred_region
      _
    $region29: #{tpu_custom_call.1} parent=1 // pred_fallthru
      _
    // Predicated region
    $region30: #{tpu_custom_call.1} parent=1 // pred_check
      _
    $region31: #{tpu_custom_call.1} parent=1 // pred_check_branch
      %71 = sbr.rel (0) target = $region33
    $region32: #{tpu_custom_call.1} parent=1 // pred_region
      %72 = dma.done [#allocation6], 64
    $region33: #{tpu_custom_call.1} parent=1 // pred_fallthru
      _
    // Predicated region
    $region34: #{tpu_custom_call.1} parent=1 // pred_check
      _
    $region35: #{tpu_custom_call.1} parent=1 // pred_check_branch
      %74 = sbr.rel (0) target = $region37
    $region36: #{tpu_custom_call.1} parent=1 // pred_region
      %75 = dma.done [#allocation9], 1024
    $region37: #{tpu_custom_call.1} parent=1 // pred_fallthru
      _
    // Predicated region
    $region38: #{tpu_custom_call.1} parent=1 // pred_check
      _
    $region39: #{tpu_custom_call.1} parent=1 // pred_check_branch
      %77 = sbr.rel (0) target = $region41
    $region40: #{tpu_custom_call.1} parent=1 // pred_region
      %78 = dma.done [#allocation9], 1024
    $region41: #{tpu_custom_call.1} parent=1 // pred_fallthru
      _
    // Predicated region
    $region42: #{tpu_custom_call.1} parent=1 // pred_check
      _
    $region43: #{tpu_custom_call.1} parent=1 // pred_check_branch
      %80 = sbr.rel (0) target = $region45
    $region44: #{tpu_custom_call.1} parent=1 // pred_region
      %81 = dma.done [#allocation12], 1024
    $region45: #{tpu_custom_call.1} parent=1 // pred_fallthru
      _
    %s83 = sld [smem:[#allocation4]]
    %v84 = vld [vmem:[#allocation5] sm:$0xf]
    %v85 = vld [vmem:[#allocation8] sm:$0xf]
    %v86 = vld [vmem:[#allocation8 + $0x4] sm:$0xf]
    %v87 = vld [vmem:[#allocation8 + $0x8] sm:$0xf]
    %v88 = vld [vmem:[#allocation8 + $0xc] sm:$0xf]
    %v89 = vld [vmem:[#allocation8 + $0x10] sm:$0xf]
    %v90 = vld [vmem:[#allocation8 + $0x14] sm:$0xf]
    %v91 = vld [vmem:[#allocation8 + $0x18] sm:$0xf]
    %v92 = vld [vmem:[#allocation8 + $0x1c] sm:$0xf]
    %v93 = vld [vmem:[#allocation8 + $0x20] sm:$0xf]
    %v94 = vld [vmem:[#allocation8 + $0x24] sm:$0xf]
    %v95 = vld [vmem:[#allocation8 + $0x28] sm:$0xf]
    %v96 = vld [vmem:[#allocation8 + $0x2c] sm:$0xf]
    %v97 = vld [vmem:[#allocation8 + $0x30] sm:$0xf]
    %v98 = vld [vmem:[#allocation8 + $0x34] sm:$0xf]
    %v99 = vld [vmem:[#allocation8 + $0x38] sm:$0xf]
    %v100 = vld [vmem:[#allocation8 + $0x3c] sm:$0xf]
    %v101 = vld [vmem:[%s3] sm:$0x1]
    %v103 = vlaneseq
    %v104 = vshrl.u32 %v103, 7
    %v105 = vsub.s32 0, %v104
    %v106 = vrot.slane %v101, %v105
    %v124 = vunpack.c.l.b16 %v85
    %v125 = vunpack.c.l.b16 %v86
    %v126 = vunpack.c.l.b16 %v87
    %v127 = vunpack.c.l.b16 %v88
    %v128 = vunpack.c.l.b16 %v89
    %v129 = vunpack.c.l.b16 %v90
    %v130 = vunpack.c.l.b16 %v91
    %v131 = vunpack.c.l.b16 %v92
    %v132 = vunpack.c.l.b16 %v93
    %v133 = vunpack.c.l.b16 %v94
    %v134 = vunpack.c.l.b16 %v95
    %v135 = vunpack.c.l.b16 %v96
    %v136 = vunpack.c.l.b16 %v97
    %v137 = vunpack.c.l.b16 %v98
    %v138 = vunpack.c.l.b16 %v99
    %v139 = vunpack.c.l.b16 %v100
    %v140 = vpack.c.b16 %v125, %v124
    %v141 = vpack.c.b16 %v127, %v126
    %v142 = vpack.c.b16 %v129, %v128
    %v143 = vpack.c.b16 %v131, %v130
    %v144 = vpack.c.b16 %v133, %v132
    %v145 = vpack.c.b16 %v135, %v134
    %v146 = vpack.c.b16 %v137, %v136
    %v147 = vpack.c.b16 %v139, %v138
    %156 = vmatprep.subr.bf16.mxu0 0
    %157 = vmatpush1.bf16.msra.mxu0 %v140
    %158 = vmatprep.subr.bf16.mxu0 0
    %159 = vmatpush1.bf16.msra.mxu0 %v141
    %160 = vmatprep.subr.bf16.mxu0 0
    %161 = vmatpush1.bf16.msra.mxu0 %v142
    %162 = vmatprep.subr.bf16.mxu0 0
    %163 = vmatpush1.bf16.msra.mxu0 %v143
    %164 = vmatprep.subr.bf16.mxu0 0
    %165 = vmatpush1.bf16.msra.mxu0 %v144
    %166 = vmatprep.subr.bf16.mxu0 0
    %167 = vmatpush1.bf16.msra.mxu0 %v145
    %168 = vmatprep.subr.bf16.mxu0 0
    %169 = vmatpush1.bf16.msra.mxu0 %v146
    %170 = vmatprep.subr.bf16.mxu0 0
    %171 = vmatpush1.bf16.msra.mxu0 %v147
    %172 = vmatprep.subr.bf16.mxu0 0
    %173 = vmatpush1.bf16.msra.mxu0 0
    %174 = vmatprep.subr.bf16.mxu0 0
    %175 = vmatpush1.bf16.msra.mxu0 0
    %176 = vmatprep.subr.bf16.mxu0 0
    %177 = vmatpush1.bf16.msra.mxu0 0
    %178 = vmatprep.subr.bf16.mxu0 0
    %179 = vmatpush1.bf16.msra.mxu0 0
    %180 = vmatprep.subr.bf16.mxu0 0
    %181 = vmatpush1.bf16.msra.mxu0 0
    %182 = vmatprep.subr.bf16.mxu0 0
    %183 = vmatpush1.bf16.msra.mxu0 0
    %184 = vmatprep.subr.bf16.mxu0 0
    %185 = vmatpush1.bf16.msra.mxu0 0
    %186 = vmatprep.subr.bf16.mxu0 0
    %187 = vmatpush1.bf16.msra.mxu0 0
    %188 = vmatprep.mubr.bf16.mxu0 0
    %189 = vmatmul.mubr.bf16.gmra.mrb[0].mxu0 %v84
    %v190 = vpop.f32.mrb[0].mxu0
    %v191 = vadd.f32 %v106, %v190
    %v192 = vpop.f32.mrb[0].mxu0
    %v193 = vpop.f32.mrb[0].mxu0
    %v194 = vpop.f32.mrb[0].mxu0
    %195 = vdwg.mxu0
    %v196 = vmax.f32 %v191, 0.0
    %v197 = vpack.c.bf16 %v196, %v196
    %198 = vst [vmem:[#allocation2] sm:$0xf] %v197
    %v199 = vld [vmem:[#allocation10] sm:$0xf]
    %v200 = vld [vmem:[#allocation10 + $0x4] sm:$0xf]
    %v201 = vld [vmem:[#allocation10 + $0x8] sm:$0xf]
    %v202 = vld [vmem:[#allocation10 + $0xc] sm:$0xf]
    %v203 = vld [vmem:[#allocation10 + $0x10] sm:$0xf]
    %v204 = vld [vmem:[#allocation10 + $0x14] sm:$0xf]
    %v205 = vld [vmem:[#allocation10 + $0x18] sm:$0xf]
    %v206 = vld [vmem:[#allocation10 + $0x1c] sm:$0xf]
    %v207 = vld [vmem:[#allocation10 + $0x20] sm:$0xf]
    %v208 = vld [vmem:[#allocation10 + $0x24] sm:$0xf]
    %v209 = vld [vmem:[#allocation10 + $0x28] sm:$0xf]
    %v210 = vld [vmem:[#allocation10 + $0x2c] sm:$0xf]
    %v211 = vld [vmem:[#allocation10 + $0x30] sm:$0xf]
    %v212 = vld [vmem:[#allocation10 + $0x34] sm:$0xf]
    %v213 = vld [vmem:[#allocation10 + $0x38] sm:$0xf]
    %v214 = vld [vmem:[#allocation10 + $0x3c] sm:$0xf]
    %v215 = vld [vmem:[%s5] sm:$0x1]
    %v217 = vlaneseq
    %v218 = vshrl.u32 %v217, 7
    %v219 = vsub.s32 0, %v218
    %v220 = vrot.slane %v215, %v219
    %p222 = scmp.gt.s32.totalorder %s83, 0
    // Predicated region
    $region46: #{tpu_custom_call.1} parent=1 // pred_check
      %p223 = pneg %p222
    $region47: #{tpu_custom_call.1} parent=1 // pred_check_branch
      %225 = sbr.rel (%p223) target = $region49
    $region48: #{tpu_custom_call.1} parent=1 // pred_region
      %v226 = vld [vmem:[#allocation2] sm:$0xf]
      %v243 = vunpack.c.l.b16 %v199
      %v244 = vunpack.c.l.b16 %v200
      %v245 = vunpack.c.l.b16 %v201
      %v246 = vunpack.c.l.b16 %v202
      %v247 = vunpack.c.l.b16 %v203
      %v248 = vunpack.c.l.b16 %v204
      %v249 = vunpack.c.l.b16 %v205
      %v250 = vunpack.c.l.b16 %v206
      %v251 = vunpack.c.l.b16 %v207
      %v252 = vunpack.c.l.b16 %v208
      %v253 = vunpack.c.l.b16 %v209
      %v254 = vunpack.c.l.b16 %v210
      %v255 = vunpack.c.l.b16 %v211
      %v256 = vunpack.c.l.b16 %v212
      %v257 = vunpack.c.l.b16 %v213
      %v258 = vunpack.c.l.b16 %v214
      %v259 = vpack.c.b16 %v244, %v243
      %v260 = vpack.c.b16 %v246, %v245
      %v261 = vpack.c.b16 %v248, %v247
      %v262 = vpack.c.b16 %v250, %v249
      %v263 = vpack.c.b16 %v252, %v251
      %v264 = vpack.c.b16 %v254, %v253
      %v265 = vpack.c.b16 %v256, %v255
      %v266 = vpack.c.b16 %v258, %v257
      %275 = vmatprep.subr.bf16.mxu0 0
      %276 = vmatpush1.bf16.msra.mxu0 %v259
      %277 = vmatprep.subr.bf16.mxu0 0
      %278 = vmatpush1.bf16.msra.mxu0 %v260
      %279 = vmatprep.subr.bf16.mxu0 0
      %280 = vmatpush1.bf16.msra.mxu0 %v261
      %281 = vmatprep.subr.bf16.mxu0 0
      %282 = vmatpush1.bf16.msra.mxu0 %v262
      %283 = vmatprep.subr.bf16.mxu0 0
      %284 = vmatpush1.bf16.msra.mxu0 %v263
      %285 = vmatprep.subr.bf16.mxu0 0
      %286 = vmatpush1.bf16.msra.mxu0 %v264
      %287 = vmatprep.subr.bf16.mxu0 0
      %288 = vmatpush1.bf16.msra.mxu0 %v265
      %289 = vmatprep.subr.bf16.mxu0 0
      %290 = vmatpush1.bf16.msra.mxu0 %v266
      %291 = vmatprep.subr.bf16.mxu0 0
      %292 = vmatpush1.bf16.msra.mxu0 0
      %293 = vmatprep.subr.bf16.mxu0 0
      %294 = vmatpush1.bf16.msra.mxu0 0
      %295 = vmatprep.subr.bf16.mxu0 0
      %296 = vmatpush1.bf16.msra.mxu0 0
      %297 = vmatprep.subr.bf16.mxu0 0
      %298 = vmatpush1.bf16.msra.mxu0 0
      %299 = vmatprep.subr.bf16.mxu0 0
      %300 = vmatpush1.bf16.msra.mxu0 0
      %301 = vmatprep.subr.bf16.mxu0 0
      %302 = vmatpush1.bf16.msra.mxu0 0
      %303 = vmatprep.subr.bf16.mxu0 0
      %304 = vmatpush1.bf16.msra.mxu0 0
      %305 = vmatprep.subr.bf16.mxu0 0
      %306 = vmatpush1.bf16.msra.mxu0 0
      %307 = vmatprep.mubr.bf16.mxu0 0
      %308 = vmatmul.mubr.bf16.gmra.mrb[0].mxu0 %v226
      %v309 = vpop.f32.mrb[0].mxu0
      %v310 = vadd.f32 %v220, %v309
      %v311 = vpop.f32.mrb[0].mxu0
      %v312 = vpop.f32.mrb[0].mxu0
      %v313 = vpop.f32.mrb[0].mxu0
      %314 = vdwg.mxu0
      %v315 = vmax.f32 %v310, 0.0
      %v316 = vpack.c.bf16 %v315, %v315
      %317 = vst [vmem:[#allocation2] sm:$0xf] %v316
    $region49: #{tpu_custom_call.1} parent=1 // pred_fallthru
      _
    %p318 = scmp.gt.s32.totalorder %s83, 1
    // Predicated region
    $region50: #{tpu_custom_call.1} parent=1 // pred_check
      %p319 = pneg %p318
    $region51: #{tpu_custom_call.1} parent=1 // pred_check_branch
      %321 = sbr.rel (%p319) target = $region53
    $region52: #{tpu_custom_call.1} parent=1 // pred_region
      %v322 = vld [vmem:[#allocation2] sm:$0xf]
      %v339 = vunpack.c.l.b16 %v199
      %v340 = vunpack.c.l.b16 %v200
      %v341 = vunpack.c.l.b16 %v201
      %v342 = vunpack.c.l.b16 %v202
      %v343 = vunpack.c.l.b16 %v203
      %v344 = vunpack.c.l.b16 %v204
      %v345 = vunpack.c.l.b16 %v205
      %v346 = vunpack.c.l.b16 %v206
      %v347 = vunpack.c.l.b16 %v207
      %v348 = vunpack.c.l.b16 %v208
      %v349 = vunpack.c.l.b16 %v209
      %v350 = vunpack.c.l.b16 %v210
      %v351 = vunpack.c.l.b16 %v211
      %v352 = vunpack.c.l.b16 %v212
      %v353 = vunpack.c.l.b16 %v213
      %v354 = vunpack.c.l.b16 %v214
      %v355 = vpack.c.b16 %v340, %v339
      %v356 = vpack.c.b16 %v342, %v341
      %v357 = vpack.c.b16 %v344, %v343
      %v358 = vpack.c.b16 %v346, %v345
      %v359 = vpack.c.b16 %v348, %v347
      %v360 = vpack.c.b16 %v350, %v349
      %v361 = vpack.c.b16 %v352, %v351
      %v362 = vpack.c.b16 %v354, %v353
      %371 = vmatprep.subr.bf16.mxu0 0
      %372 = vmatpush1.bf16.msra.mxu0 %v355
      %373 = vmatprep.subr.bf16.mxu0 0
      %374 = vmatpush1.bf16.msra.mxu0 %v356
      %375 = vmatprep.subr.bf16.mxu0 0
      %376 = vmatpush1.bf16.msra.mxu0 %v357
      %377 = vmatprep.subr.bf16.mxu0 0
      %378 = vmatpush1.bf16.msra.mxu0 %v358
      %379 = vmatprep.subr.bf16.mxu0 0
      %380 = vmatpush1.bf16.msra.mxu0 %v359
      %381 = vmatprep.subr.bf16.mxu0 0
      %382 = vmatpush1.bf16.msra.mxu0 %v360
      %383 = vmatprep.subr.bf16.mxu0 0
      %384 = vmatpush1.bf16.msra.mxu0 %v361
      %385 = vmatprep.subr.bf16.mxu0 0
      %386 = vmatpush1.bf16.msra.mxu0 %v362
      %387 = vmatprep.subr.bf16.mxu0 0
      %388 = vmatpush1.bf16.msra.mxu0 0
      %389 = vmatprep.subr.bf16.mxu0 0
      %390 = vmatpush1.bf16.msra.mxu0 0
      %391 = vmatprep.subr.bf16.mxu0 0
      %392 = vmatpush1.bf16.msra.mxu0 0
      %393 = vmatprep.subr.bf16.mxu0 0
      %394 = vmatpush1.bf16.msra.mxu0 0
      %395 = vmatprep.subr.bf16.mxu0 0
      %396 = vmatpush1.bf16.msra.mxu0 0
      %397 = vmatprep.subr.bf16.mxu0 0
      %398 = vmatpush1.bf16.msra.mxu0 0
      %399 = vmatprep.subr.bf16.mxu0 0
      %400 = vmatpush1.bf16.msra.mxu0 0
      %401 = vmatprep.subr.bf16.mxu0 0
      %402 = vmatpush1.bf16.msra.mxu0 0
      %403 = vmatprep.mubr.bf16.mxu0 0
      %404 = vmatmul.mubr.bf16.gmra.mrb[0].mxu0 %v322
      %v405 = vpop.f32.mrb[0].mxu0
      %v406 = vadd.f32 %v220, %v405
      %v407 = vpop.f32.mrb[0].mxu0
      %v408 = vpop.f32.mrb[0].mxu0
      %v409 = vpop.f32.mrb[0].mxu0
      %410 = vdwg.mxu0
      %v411 = vmax.f32 %v406, 0.0
      %v412 = vpack.c.bf16 %v411, %v411
      %413 = vst [vmem:[#allocation2] sm:$0xf] %v412
    $region53: #{tpu_custom_call.1} parent=1 // pred_fallthru
      _
    %p414 = scmp.gt.s32.totalorder %s83, 2
    // Predicated region
    $region54: #{tpu_custom_call.1} parent=1 // pred_check
      %p415 = pneg %p414
    $region55: #{tpu_custom_call.1} parent=1 // pred_check_branch
      %417 = sbr.rel (%p415) target = $region57
    $region56: #{tpu_custom_call.1} parent=1 // pred_region
      %v418 = vld [vmem:[#allocation2] sm:$0xf]
      %v435 = vunpack.c.l.b16 %v199
      %v436 = vunpack.c.l.b16 %v200
      %v437 = vunpack.c.l.b16 %v201
      %v438 = vunpack.c.l.b16 %v202
      %v439 = vunpack.c.l.b16 %v203
      %v440 = vunpack.c.l.b16 %v204
      %v441 = vunpack.c.l.b16 %v205
      %v442 = vunpack.c.l.b16 %v206
      %v443 = vunpack.c.l.b16 %v207
      %v444 = vunpack.c.l.b16 %v208
      %v445 = vunpack.c.l.b16 %v209
      %v446 = vunpack.c.l.b16 %v210
      %v447 = vunpack.c.l.b16 %v211
      %v448 = vunpack.c.l.b16 %v212
      %v449 = vunpack.c.l.b16 %v213
      %v450 = vunpack.c.l.b16 %v214
      %v451 = vpack.c.b16 %v436, %v435
      %v452 = vpack.c.b16 %v438, %v437
      %v453 = vpack.c.b16 %v440, %v439
      %v454 = vpack.c.b16 %v442, %v441
      %v455 = vpack.c.b16 %v444, %v443
      %v456 = vpack.c.b16 %v446, %v445
      %v457 = vpack.c.b16 %v448, %v447
      %v458 = vpack.c.b16 %v450, %v449
      %467 = vmatprep.subr.bf16.mxu0 0
      %468 = vmatpush1.bf16.msra.mxu0 %v451
      %469 = vmatprep.subr.bf16.mxu0 0
      %470 = vmatpush1.bf16.msra.mxu0 %v452
      %471 = vmatprep.subr.bf16.mxu0 0
      %472 = vmatpush1.bf16.msra.mxu0 %v453
      %473 = vmatprep.subr.bf16.mxu0 0
      %474 = vmatpush1.bf16.msra.mxu0 %v454
      %475 = vmatprep.subr.bf16.mxu0 0
      %476 = vmatpush1.bf16.msra.mxu0 %v455
      %477 = vmatprep.subr.bf16.mxu0 0
      %478 = vmatpush1.bf16.msra.mxu0 %v456
      %479 = vmatprep.subr.bf16.mxu0 0
      %480 = vmatpush1.bf16.msra.mxu0 %v457
      %481 = vmatprep.subr.bf16.mxu0 0
      %482 = vmatpush1.bf16.msra.mxu0 %v458
      %483 = vmatprep.subr.bf16.mxu0 0
      %484 = vmatpush1.bf16.msra.mxu0 0
      %485 = vmatprep.subr.bf16.mxu0 0
      %486 = vmatpush1.bf16.msra.mxu0 0
      %487 = vmatprep.subr.bf16.mxu0 0
      %488 = vmatpush1.bf16.msra.mxu0 0
      %489 = vmatprep.subr.bf16.mxu0 0
      %490 = vmatpush1.bf16.msra.mxu0 0
      %491 = vmatprep.subr.bf16.mxu0 0
      %492 = vmatpush1.bf16.msra.mxu0 0
      %493 = vmatprep.subr.bf16.mxu0 0
      %494 = vmatpush1.bf16.msra.mxu0 0
      %495 = vmatprep.subr.bf16.mxu0 0
      %496 = vmatpush1.bf16.msra.mxu0 0
      %497 = vmatprep.subr.bf16.mxu0 0
      %498 = vmatpush1.bf16.msra.mxu0 0
      %499 = vmatprep.mubr.bf16.mxu0 0
      %500 = vmatmul.mubr.bf16.gmra.mrb[0].mxu0 %v418
      %v501 = vpop.f32.mrb[0].mxu0
      %v502 = vadd.f32 %v220, %v501
      %v503 = vpop.f32.mrb[0].mxu0
      %v504 = vpop.f32.mrb[0].mxu0
      %v505 = vpop.f32.mrb[0].mxu0
      %506 = vdwg.mxu0
      %v507 = vmax.f32 %v502, 0.0
      %v508 = vpack.c.bf16 %v507, %v507
      %509 = vst [vmem:[#allocation2] sm:$0xf] %v508
    $region57: #{tpu_custom_call.1} parent=1 // pred_fallthru
      _
    %v510 = vld [vmem:[#allocation2] sm:$0xf]
    %v511 = vld [vmem:[#allocation11] sm:$0xf]
    %v512 = vld [vmem:[#allocation11 + $0x4] sm:$0xf]
    %v513 = vld [vmem:[#allocation11 + $0x8] sm:$0xf]
    %v514 = vld [vmem:[#allocation11 + $0xc] sm:$0xf]
    %v515 = vld [vmem:[#allocation11 + $0x10] sm:$0xf]
    %v516 = vld [vmem:[#allocation11 + $0x14] sm:$0xf]
    %v517 = vld [vmem:[#allocation11 + $0x18] sm:$0xf]
    %v518 = vld [vmem:[#allocation11 + $0x1c] sm:$0xf]
    %v519 = vld [vmem:[#allocation11 + $0x20] sm:$0xf]
    %v520 = vld [vmem:[#allocation11 + $0x24] sm:$0xf]
    %v521 = vld [vmem:[#allocation11 + $0x28] sm:$0xf]
    %v522 = vld [vmem:[#allocation11 + $0x2c] sm:$0xf]
    %v523 = vld [vmem:[#allocation11 + $0x30] sm:$0xf]
    %v524 = vld [vmem:[#allocation11 + $0x34] sm:$0xf]
    %v525 = vld [vmem:[#allocation11 + $0x38] sm:$0xf]
    %v526 = vld [vmem:[#allocation11 + $0x3c] sm:$0xf]
    %v527 = vld [vmem:[%s7] sm:$0x1]
    %v529 = vlaneseq
    %v530 = vshrl.u32 %v529, 7
    %v531 = vsub.s32 0, %v530
    %v532 = vrot.slane %v527, %v531
    %v550 = vunpack.c.l.b16 %v511
    %v551 = vunpack.c.l.b16 %v512
    %v552 = vunpack.c.l.b16 %v513
    %v553 = vunpack.c.l.b16 %v514
    %v554 = vunpack.c.l.b16 %v515
    %v555 = vunpack.c.l.b16 %v516
    %v556 = vunpack.c.l.b16 %v517
    %v557 = vunpack.c.l.b16 %v518
    %v558 = vunpack.c.l.b16 %v519
    %v559 = vunpack.c.l.b16 %v520
    %v560 = vunpack.c.l.b16 %v521
    %v561 = vunpack.c.l.b16 %v522
    %v562 = vunpack.c.l.b16 %v523
    %v563 = vunpack.c.l.b16 %v524
    %v564 = vunpack.c.l.b16 %v525
    %v565 = vunpack.c.l.b16 %v526
    %v566 = vpack.c.b16 %v551, %v550
    %v567 = vpack.c.b16 %v553, %v552
    %v568 = vpack.c.b16 %v555, %v554
    %v569 = vpack.c.b16 %v557, %v556
    %v570 = vpack.c.b16 %v559, %v558
    %v571 = vpack.c.b16 %v561, %v560
    %v572 = vpack.c.b16 %v563, %v562
    %v573 = vpack.c.b16 %v565, %v564
    %582 = vmatprep.subr.bf16.mxu0 0
    %583 = vmatpush1.bf16.msra.mxu0 %v566
    %584 = vmatprep.subr.bf16.mxu0 0
    %585 = vmatpush1.bf16.msra.mxu0 %v567
    %586 = vmatprep.subr.bf16.mxu0 0
    %587 = vmatpush1.bf16.msra.mxu0 %v568
    %588 = vmatprep.subr.bf16.mxu0 0
    %589 = vmatpush1.bf16.msra.mxu0 %v569
    %590 = vmatprep.subr.bf16.mxu0 0
    %591 = vmatpush1.bf16.msra.mxu0 %v570
    %592 = vmatprep.subr.bf16.mxu0 0
    %593 = vmatpush1.bf16.msra.mxu0 %v571
    %594 = vmatprep.subr.bf16.mxu0 0
    %595 = vmatpush1.bf16.msra.mxu0 %v572
    %596 = vmatprep.subr.bf16.mxu0 0
    %597 = vmatpush1.bf16.msra.mxu0 %v573
    %598 = vmatprep.subr.bf16.mxu0 0
    %599 = vmatpush1.bf16.msra.mxu0 0
    %600 = vmatprep.subr.bf16.mxu0 0
    %601 = vmatpush1.bf16.msra.mxu0 0
    %602 = vmatprep.subr.bf16.mxu0 0
    %603 = vmatpush1.bf16.msra.mxu0 0
    %604 = vmatprep.subr.bf16.mxu0 0
    %605 = vmatpush1.bf16.msra.mxu0 0
    %606 = vmatprep.subr.bf16.mxu0 0
    %607 = vmatpush1.bf16.msra.mxu0 0
    %608 = vmatprep.subr.bf16.mxu0 0
    %609 = vmatpush1.bf16.msra.mxu0 0
    %610 = vmatprep.subr.bf16.mxu0 0
    %611 = vmatpush1.bf16.msra.mxu0 0
    %612 = vmatprep.subr.bf16.mxu0 0
    %613 = vmatpush1.bf16.msra.mxu0 0
    %614 = vmatprep.mubr.bf16.mxu0 0
    %615 = vmatmul.mubr.bf16.gmra.mrb[0].mxu0 %v510
    %v616 = vpop.f32.mrb[0].mxu0
    %v617 = vadd.f32 %v532, %v616
    %v618 = vpop.f32.mrb[0].mxu0
    %v619 = vpop.f32.mrb[0].mxu0
    %v620 = vpop.f32.mrb[0].mxu0
    %621 = vdwg.mxu0
    %622 = vst [vmem:[#allocation13] sm:$0xff] %v617
    // Predicated region
    $region58: #{tpu_custom_call.1} parent=1 // pred_check
      _
    $region59: #{tpu_custom_call.1} parent=1 // pred_check_branch
      %624 = sbr.rel (0) target = $region61
    $region60: #{tpu_custom_call.1} parent=1 // pred_region
      %s626 = ssub.s32 128, 128
      %627 = vsyncadd [#allocation7], %s626
      %s629 = sshll.u32 [#allocation13], 4
      %s630 = int_to_ptr.vmem [resolvable:$true] %s629
      %632 = dma.vmem_to_hbm [thread:$0]  %s630, 128, %s8, [#allocation7]
    $region61: #{tpu_custom_call.1} parent=1 // pred_fallthru
      _
    // Predicated region
    $region62: #{tpu_custom_call.1} parent=1 // pred_check
      _
    $region63: #{tpu_custom_call.1} parent=1 // pred_check_branch
      %634 = sbr.rel (0) target = $region65
    $region64: #{tpu_custom_call.1} parent=1 // pred_region
      %635 = dma.done [#allocation7], 128
    $region65: #{tpu_custom_call.1} parent=1 // pred_fallthru
      _
    %636 = vsyncpa [#allocation6], 1
    %637 = vsyncpa [#allocation9], 1
    %638 = vsyncpa [#allocation12], 1
    %639 = vsyncpa [#allocation7], 1

</llo_original>
